<compile_context>
chip_gen: v5e
topology: v5e:2x2
jax: 0.10.0
libtpu: 0.0.40
codegen_flags: <defaults>
</compile_context>

<pallas_src>
import jax
import jax.numpy as jnp
from jax.experimental import pallas as pl
from jax.experimental.pallas import tpu as pltpu

LANE = 128
COMPUTE_DTYPE = jnp.bfloat16  # MXU input dtype; accumulation stays f32


def _round_up(x, m):
    return (x + m - 1) // m * m


def _vmem_capacity_bytes():
    """Per-core VMEM capacity; conservative v7x fallback if the query is unavailable."""
    try:
        info = pltpu.get_tpu_info()
        for attr in ("vmem_capacity_bytes", "vmem_size_bytes", "vmem_bytes"):
            v = getattr(info, attr, None)
            if v:
                return int(v)
    except Exception:
        pass
    return 64 * 2**20


def _choose_tb(B, dp, kp, vmem_cap):
    """Batch tile: multiple of 8, fits VMEM, prefers >= 2 grid steps, 512 max."""
    b8 = _round_up(max(B, 1), 8)
    # Conservatively assume the resident weights may be double-buffered.
    resident = 2 * (2 * dp * kp * 2) + 2 * (kp + dp) * 4
    avail = int(0.75 * vmem_cap) - resident
    per_row = 8 * dp  # 2 bufs * dp * (2B in + 2B out)
    tb_vmem = max(8, (avail // per_row) // 8 * 8) if avail > 8 * per_row else 8
    # Don't pad a small batch up to one huge tile; keep >= 2 grid steps.
    tb_batch = max(8, _round_up((b8 + 1) // 2, 8))
    return max(8, min(512, tb_vmem, tb_batch))


def autorec_kernel(r_ref, w1t_ref, b1_ref, w2t_ref, b2_ref, o_ref):
    # First linear: (TB, dp) @ (dp, kp) -> (TB, kp); bf16 MXU, f32 accumulate.
    z = jnp.dot(r_ref[...], w1t_ref[...], preferred_element_type=jnp.float32)
    h = jax.nn.sigmoid(z + b1_ref[...])  # f32 epilogue (bias + sigmoid on EUP/VPU)
    # Dropout: identity (eval mode).
    # Second linear: (TB, kp) @ (kp, dp) -> (TB, dp); h stays in registers (no scratch).
    out = jnp.dot(h.astype(COMPUTE_DTYPE), w2t_ref[...], preferred_element_type=jnp.float32)
    o_ref[...] = (out + b2_ref[...]).astype(o_ref.dtype)


def prepare_autorec_params(w1, b1, w2, b2):
    """One-time prep (outside the jitted forward): transpose, bf16 cast, zero-pad.

    PyTorch Linear layout: w1 (k, d), b1 (k,), w2 (d, k), b2 (d,).
    Returns w1t (dp, kp) bf16, b1p (1, kp) f32, w2t (kp, dp) bf16, b2p (1, dp) f32.
    Zero-padding w2t's extra k-rows / extra d-cols and the biases guarantees the
    padded lanes (where h = sigmoid(0) = 0.5) contribute exactly 0 to the output.
    """
    k, d = w1.shape
    dp, kp = _round_up(d, LANE), _round_up(k, LANE)
    w1t = jnp.zeros((dp, kp), COMPUTE_DTYPE).at[:d, :k].set(w1.T.astype(COMPUTE_DTYPE))
    w2t = jnp.zeros((kp, dp), COMPUTE_DTYPE).at[:k, :d].set(w2.T.astype(COMPUTE_DTYPE))
    b1p = jnp.zeros((1, kp), jnp.float32).at[0, :k].set(b1.astype(jnp.float32))
    b2p = jnp.zeros((1, dp), jnp.float32).at[0, :d].set(b2.astype(jnp.float32))
    return w1t, b1p, w2t, b2p


@jax.jit
def autorec_forward(r, w1t, b1p, w2t, b2p):
    """r: (B, d); params from prepare_autorec_params. Returns (B, d) bf16."""
    B, d = r.shape
    dp, kp = w1t.shape

    vmem_cap = _vmem_capacity_bytes()
    tb = _choose_tb(B, dp, kp, vmem_cap)
    bp = _round_up(max(B, 1), tb)

    # Pad / cast the input only as much as actually needed (fast paths avoid the
    # extra full HBM read+write pass around a memory-bound kernel).
    if B == bp and d == dp and r.dtype == COMPUTE_DTYPE:
        r_p = r
    elif d == dp:
        r_p = jnp.pad(r.astype(COMPUTE_DTYPE), ((0, bp - B), (0, 0)))
    else:
        r_p = jnp.pad(r.astype(COMPUTE_DTYPE), ((0, bp - B), (0, dp - d)))

    # VMEM budget: (possibly double-buffered) resident bf16 weights + biases +
    # double-buffered bf16 r/out tiles + headroom for in-kernel f32 temporaries.
    vmem_need = (
        2 * (2 * dp * kp * 2)      # w1t + w2t (bf16), x2 for potential double-buffering
        + 2 * (kp + dp) * 4        # biases (f32), x2
        + 2 * tb * dp * 2          # double-buffered r tiles (bf16)
        + 2 * tb * dp * 2          # double-buffered out tiles (bf16)
        + tb * kp * 4 + tb * dp * 4  # f32 z / out temporaries headroom
    )
    vmem_limit = int(min(max(vmem_need, 16 * 2**20), int(0.9 * vmem_cap)))

    cost = pl.CostEstimate(
        flops=4 * bp * dp * kp,                     # two matmuls
        transcendentals=bp * kp,                    # sigmoid
        bytes_accessed=2 * bp * dp * 2 + 2 * dp * kp * 2 + (kp + dp) * 4,
    )

    out_p = pl.pallas_call(
        autorec_kernel,
        out_shape=jax.ShapeDtypeStruct((bp, dp), COMPUTE_DTYPE),
        grid=(bp // tb,),
        in_specs=[
            pl.BlockSpec((tb, dp), lambda i: (i, 0)),   # r: tiled over batch
            pl.BlockSpec((dp, kp), lambda i: (0, 0)),   # w1t: VMEM-resident
            pl.BlockSpec((1, kp), lambda i: (0, 0)),    # b1
            pl.BlockSpec((kp, dp), lambda i: (0, 0)),   # w2t: VMEM-resident
            pl.BlockSpec((1, dp), lambda i: (0, 0)),    # b2
        ],
        out_specs=pl.BlockSpec((tb, dp), lambda i: (i, 0)),
        compiler_params=pltpu.CompilerParams(
            dimension_semantics=("parallel",),          # independent batch tiles
            vmem_limit_bytes=vmem_limit,
        ),
        cost_estimate=cost,
    )(r_p, w1t, b1p, w2t, b2p)

    if B == bp and d == dp:
        return out_p
    return out_p[:B, :d]


def autorec_reference(r, w1, b1, w2, b2):
    h = jax.nn.sigmoid(r @ w1.T + b1)
    return h @ w2.T + b2


if __name__ == "__main__":
    # Small shapes consistent with AutoRec(d, k, dropout); deliberately NOT multiples
    # of 128 so the padding path is exercised, and B large enough that the batch
    # axis is tiled over >= 2 grid steps.
    B, d, k = 200, 300, 100

    key = jax.random.PRNGKey(0)
    k_r, k_w1, k_b1, k_w2, k_b2 = jax.random.split(key, 5)

    r = jax.random.normal(k_r, (B, d), dtype=jnp.float32)

    # Deterministic PyTorch-style Linear init: U(-1/sqrt(fan_in), 1/sqrt(fan_in)).
    bound1 = 1.0 / (d ** 0.5)
    w1 = jax.random.uniform(k_w1, (k, d), jnp.float32, -bound1, bound1)
    b1 = jax.random.uniform(k_b1, (k,), jnp.float32, -bound1, bound1)
    bound2 = 1.0 / (k ** 0.5)
    w2 = jax.random.uniform(k_w2, (d, k), jnp.float32, -bound2, bound2)
    b2 = jax.random.uniform(k_b2, (d,), jnp.float32, -bound2, bound2)

    # One-time weight preparation (transpose + bf16 cast + pad) outside the forward.
    w1t, b1p, w2t, b2p = prepare_autorec_params(w1, b1, w2, b2)
    w1t, b1p, w2t, b2p = jax.block_until_ready((w1t, b1p, w2t, b2p))

    out = autorec_forward(r, w1t, b1p, w2t, b2p)
    out = jax.block_until_ready(out)

    ref = autorec_reference(r, w1, b1, w2, b2)
    assert out.shape == (B, d)
    # bf16 matmuls + bf16 output vs f32 reference -> relaxed tolerance.
    assert jnp.allclose(out.astype(jnp.float32), ref, atol=3e-2, rtol=3e-2), "mismatch vs reference"

    print("KERNEL_OK")
</pallas_src>

<mosaic_0001>
module attributes {stable_mosaic.version = 11 : i64} {
  func.func @autorec_kernel(%arg0: i32, %arg1: memref<104x384xbf16, #tpu.memory_space<vmem>>, %arg2: memref<384x128xbf16, #tpu.memory_space<vmem>>, %arg3: memref<1x128xf32, #tpu.memory_space<vmem>>, %arg4: memref<128x384xbf16, #tpu.memory_space<vmem>>, %arg5: memref<1x384xf32, #tpu.memory_space<vmem>>, %arg6: memref<104x384xbf16, #tpu.memory_space<vmem>>) attributes {dimension_semantics = [#tpu.dimension_semantics<parallel>], iteration_bounds = array<i64: 2>, scalar_prefetch = 0 : i64, scratch_operands = 0 : i64, tpu.core_type = #tpu.core_type<tc>, window_params = [{transform_indices = @transform_0, window_bounds = array<i64: 104, 384>}, {pipeline_mode = #tpu.pipeline_mode<synchronous>, transform_indices = @transform_1, window_bounds = array<i64: 384, 128>}, {pipeline_mode = #tpu.pipeline_mode<synchronous>, transform_indices = @transform_2, window_bounds = array<i64: 1, 128>}, {pipeline_mode = #tpu.pipeline_mode<synchronous>, transform_indices = @transform_3, window_bounds = array<i64: 128, 384>}, {pipeline_mode = #tpu.pipeline_mode<synchronous>, transform_indices = @transform_4, window_bounds = array<i64: 1, 384>}, {transform_indices = @transform_5, window_bounds = array<i64: 104, 384>}]} {
    %c0 = arith.constant 0 : index
    %c0_0 = arith.constant 0 : index
    %0 = vector.load %arg1[%c0, %c0_0] : memref<104x384xbf16, #tpu.memory_space<vmem>>, vector<104x384xbf16>
    %c0_1 = arith.constant 0 : index
    %c0_2 = arith.constant 0 : index
    %1 = vector.load %arg2[%c0_1, %c0_2] : memref<384x128xbf16, #tpu.memory_space<vmem>>, vector<384x128xbf16>
    %cst = arith.constant dense<0.000000e+00> : vector<104x128xf32>
    %2 = tpu.matmul %0, %1, %cst {dimension_numbers = #tpu.dot_dimension_numbers<[1], [0], [0], [1], [0, 0, 1, 1], [], []>} : vector<104x384xbf16>, vector<384x128xbf16>, vector<104x128xf32> -> vector<104x128xf32>
    %c0_3 = arith.constant 0 : index
    %c0_4 = arith.constant 0 : index
    %3 = vector.load %arg3[%c0_3, %c0_4] : memref<1x128xf32, #tpu.memory_space<vmem>>, vector<1x128xf32>
    %4 = vector.broadcast %3 : vector<1x128xf32> to vector<104x128xf32>
    %5 = arith.addf %2, %4 : vector<104x128xf32>
    %6 = arith.negf %5 : vector<104x128xf32>
    %7 = math.exp %6 : vector<104x128xf32>
    %cst_5 = arith.constant 1.000000e+00 : f32
    %8 = vector.broadcast %cst_5 : f32 to vector<104x128xf32>
    %9 = arith.addf %8, %7 : vector<104x128xf32>
    %10 = arith.divf %8, %9 : vector<104x128xf32>
    %11 = arith.truncf %10 : vector<104x128xf32> to vector<104x128xbf16>
    %c0_6 = arith.constant 0 : index
    %c0_7 = arith.constant 0 : index
    %12 = vector.load %arg4[%c0_6, %c0_7] : memref<128x384xbf16, #tpu.memory_space<vmem>>, vector<128x384xbf16>
    %cst_8 = arith.constant dense<0.000000e+00> : vector<104x384xf32>
    %13 = tpu.matmul %11, %12, %cst_8 {dimension_numbers = #tpu.dot_dimension_numbers<[1], [0], [0], [1], [0, 0, 1, 1], [], []>} : vector<104x128xbf16>, vector<128x384xbf16>, vector<104x384xf32> -> vector<104x384xf32>
    %c0_9 = arith.constant 0 : index
    %c0_10 = arith.constant 0 : index
    %14 = vector.load %arg5[%c0_9, %c0_10] : memref<1x384xf32, #tpu.memory_space<vmem>>, vector<1x384xf32>
    %15 = vector.broadcast %14 : vector<1x384xf32> to vector<104x384xf32>
    %16 = arith.addf %13, %15 : vector<104x384xf32>
    %17 = arith.truncf %16 : vector<104x384xf32> to vector<104x384xbf16>
    %c0_11 = arith.constant 0 : index
    %c0_12 = arith.constant 0 : index
    %18 = vector.load %arg6[%c0_11, %c0_12] : memref<104x384xbf16, #tpu.memory_space<vmem>>, vector<104x384xbf16>
    tpu.vector_store %arg6[%c0_11, %c0_12], %17 {strides = array<i32>} : memref<104x384xbf16, #tpu.memory_space<vmem>>, vector<104x384xbf16>,
    return
  }
  func.func @transform_0(%arg0: i32) -> (i32, i32) {
    %c0_i32 = arith.constant 0 : i32
    %c0_i32_0 = arith.constant 0 : i32
    return %arg0, %c0_i32 : i32, i32
  }
  func.func @transform_1(%arg0: i32) -> (i32, i32) {
    %c0_i32 = arith.constant 0 : i32
    %c0_i32_0 = arith.constant 0 : i32
    %c0_i32_1 = arith.constant 0 : i32
    return %c0_i32, %c0_i32_0 : i32, i32
  }
  func.func @transform_2(%arg0: i32) -> (i32, i32) {
    %c0_i32 = arith.constant 0 : i32
    %c0_i32_0 = arith.constant 0 : i32
    %c0_i32_1 = arith.constant 0 : i32
    return %c0_i32, %c0_i32_0 : i32, i32
  }
  func.func @transform_3(%arg0: i32) -> (i32, i32) {
    %c0_i32 = arith.constant 0 : i32
    %c0_i32_0 = arith.constant 0 : i32
    %c0_i32_1 = arith.constant 0 : i32
    return %c0_i32, %c0_i32_0 : i32, i32
  }
  func.func @transform_4(%arg0: i32) -> (i32, i32) {
    %c0_i32 = arith.constant 0 : i32
    %c0_i32_0 = arith.constant 0 : i32
    %c0_i32_1 = arith.constant 0 : i32
    return %c0_i32, %c0_i32_0 : i32, i32
  }
  func.func @transform_5(%arg0: i32) -> (i32, i32) {
    %c0_i32 = arith.constant 0 : i32
    %c0_i32_0 = arith.constant 0 : i32
    return %arg0, %c0_i32 : i32, i32
  }
}

</mosaic_0001>

<llo_original>
// kernel: autorec_forward.1
$region0: #{autorec_forward.1}
  #allocation0 [shape = 'u32[]', space=smem, size = 0x4, offset = 0x4, fixed_abs, tag = 'smem constant byte address 0x4 - core index']
  #allocation1 [shape = 'u32[72,128]{1,0:T(1,128)}', space=vmem, size = 0x9000, scoped, tag = 'internal scratch']
  %s0 = inlined_call_operand.vmem [shape: bf16[208,384], index: 0, kind: input, shape index: {}]
  %s1 = inlined_call_operand.vmem [shape: bf16[384,128], index: 1, kind: input, shape index: {}]
  %s2 = inlined_call_operand.vmem [shape: f32[1,128], index: 2, kind: input, shape index: {}]
  %s3 = inlined_call_operand.vmem [shape: bf16[128,384], index: 3, kind: input, shape index: {}]
  %s4 = inlined_call_operand.vmem [shape: f32[1,384], index: 4, kind: input, shape index: {}]
  %s5 = inlined_call_operand.vmem [shape: bf16[208,384], index: 5, kind: output, shape index: {}]
  %s6 = sld [smem:[#allocation0]]
  $region53: #{autorec_forward.1} parent=0
    _
  %s8 = ssub.s32 1, %s6
  %s9 = scalar_select 0, %s8, %s6
  loop: start=0, step=1, limit=4
  $region2: #{autorec_forward.1} parent=0 // loop_pre_header
    _
  $region3: #{autorec_forward.1} parent=0 // loop_header
    %s11 = sphi 0, %s15
    %p12 = scmp.ge.s32.totalorder %s11, 4
    %s21 = sphi 0, %s23
    %s24 = sphi 0, %s21
    %s25 = sphi 0, %s24
    %s41 = sphi 0, %s25
    %s45 = sphi 0, %s45
    %s47 = sphi 0, %s45
    %s48 = sphi 0, %s47
    %s62 = sphi 0, %s48
    %s66 = sphi 0, %s66
    %s68 = sphi 0, %s66
    %s69 = sphi 0, %s68
    %s83 = sphi 0, %s69
    %s87 = sphi 0, %s87
    %s89 = sphi 0, %s87
    %s90 = sphi 0, %s89
    %s104 = sphi 0, %s90
    %s108 = sphi 0, %s108
    %s110 = sphi 0, %s108
    %s111 = sphi 0, %s110
    %s125 = sphi 0, %s111
    %s131 = sphi 0, %s133
    %s134 = sphi 0, %s131
    %s135 = sphi 0, %s134
    %s151 = sphi 0, %s135
  $region4: #{autorec_forward.1} parent=0 // loop_header_branch
    %14 = sbr.rel (%p12) target = $region8
  $region5: #{autorec_forward.1} parent=0 // loop_body
    %s16 = ssub.s32 %s11, 1
    %s17 = ssub.s32 %s11, 2
    %s18 = sadd.s32 %s11, 1
    %s19 = ssub.s32 %s11, %s18
    %p20 = scmp.eq.s32.totalorder %s19, 0
    %s22 = sadd.s32 %s21, 1
    %s23 = scalar_select %p20, %s21, %s22
    %p26 = pneg %p20
    %p27 = scmp.eq.s32.totalorder %s11, 1
    %p28 = por %p26, %p27
    %p29 = scmp.ne.s32.totalorder %s21, %s24
    %p30 = scmp.eq.s32.totalorder %s11, 0
    %p31 = por %p29, %p30
    %p32 = scmp.ne.s32.totalorder %s21, %s24
    %p33 = scmp.eq.s32.totalorder %s16, 1
    %p34 = por %p32, %p33
    %p35 = scmp.ne.s32.totalorder %s24, %s25
    %p36 = scmp.eq.s32.totalorder %s16, 0
    %p37 = por %p35, %p36
    %p38 = scmp.ne.s32.totalorder %s24, %s25
    %p39 = scmp.eq.s32.totalorder %s17, 1
    %p40 = por %p38, %p39
    %p42 = scmp.ne.s32.totalorder %s25, %s41
    %p43 = scmp.eq.s32.totalorder %s17, 0
    %p44 = por %p42, %p43
    %s46 = sadd.s32 %s45, 1
    %p49 = scmp.eq.s32.totalorder %s11, 1
    %p50 = scmp.ne.s32.totalorder %s45, %s47
    %p51 = scmp.eq.s32.totalorder %s11, 0
    %p52 = por %p50, %p51
    %p53 = scmp.ne.s32.totalorder %s45, %s47
    %p54 = scmp.eq.s32.totalorder %s16, 1
    %p55 = por %p53, %p54
    %p56 = scmp.ne.s32.totalorder %s47, %s48
    %p57 = scmp.eq.s32.totalorder %s16, 0
    %p58 = por %p56, %p57
    %p59 = scmp.ne.s32.totalorder %s47, %s48
    %p60 = scmp.eq.s32.totalorder %s17, 1
    %p61 = por %p59, %p60
    %p63 = scmp.ne.s32.totalorder %s48, %s62
    %p64 = scmp.eq.s32.totalorder %s17, 0
    %p65 = por %p63, %p64
    %s67 = sadd.s32 %s66, 1
    %p70 = scmp.eq.s32.totalorder %s11, 1
    %p71 = scmp.ne.s32.totalorder %s66, %s68
    %p72 = scmp.eq.s32.totalorder %s11, 0
    %p73 = por %p71, %p72
    %p74 = scmp.ne.s32.totalorder %s66, %s68
    %p75 = scmp.eq.s32.totalorder %s16, 1
    %p76 = por %p74, %p75
    %p77 = scmp.ne.s32.totalorder %s68, %s69
    %p78 = scmp.eq.s32.totalorder %s16, 0
    %p79 = por %p77, %p78
    %p80 = scmp.ne.s32.totalorder %s68, %s69
    %p81 = scmp.eq.s32.totalorder %s17, 1
    %p82 = por %p80, %p81
    %p84 = scmp.ne.s32.totalorder %s69, %s83
    %p85 = scmp.eq.s32.totalorder %s17, 0
    %p86 = por %p84, %p85
    %s88 = sadd.s32 %s87, 1
    %p91 = scmp.eq.s32.totalorder %s11, 1
    %p92 = scmp.ne.s32.totalorder %s87, %s89
    %p93 = scmp.eq.s32.totalorder %s11, 0
    %p94 = por %p92, %p93
    %p95 = scmp.ne.s32.totalorder %s87, %s89
    %p96 = scmp.eq.s32.totalorder %s16, 1
    %p97 = por %p95, %p96
    %p98 = scmp.ne.s32.totalorder %s89, %s90
    %p99 = scmp.eq.s32.totalorder %s16, 0
    %p100 = por %p98, %p99
    %p101 = scmp.ne.s32.totalorder %s89, %s90
    %p102 = scmp.eq.s32.totalorder %s17, 1
    %p103 = por %p101, %p102
    %p105 = scmp.ne.s32.totalorder %s90, %s104
    %p106 = scmp.eq.s32.totalorder %s17, 0
    %p107 = por %p105, %p106
    %s109 = sadd.s32 %s108, 1
    %p112 = scmp.eq.s32.totalorder %s11, 1
    %p113 = scmp.ne.s32.totalorder %s108, %s110
    %p114 = scmp.eq.s32.totalorder %s11, 0
    %p115 = por %p113, %p114
    %p116 = scmp.ne.s32.totalorder %s108, %s110
    %p117 = scmp.eq.s32.totalorder %s16, 1
    %p118 = por %p116, %p117
    %p119 = scmp.ne.s32.totalorder %s110, %s111
    %p120 = scmp.eq.s32.totalorder %s16, 0
    %p121 = por %p119, %p120
    %p122 = scmp.ne.s32.totalorder %s110, %s111
    %p123 = scmp.eq.s32.totalorder %s17, 1
    %p124 = por %p122, %p123
    %p126 = scmp.ne.s32.totalorder %s111, %s125
    %p127 = scmp.eq.s32.totalorder %s17, 0
    %p128 = por %p126, %p127
    %s129 = ssub.s32 %s11, %s18
    %p130 = scmp.eq.s32.totalorder %s129, 0
    %s132 = sadd.s32 %s131, 1
    %s133 = scalar_select %p130, %s131, %s132
    %p136 = pneg %p130
    %p137 = scmp.eq.s32.totalorder %s11, 1
    %p138 = por %p136, %p137
    %p139 = scmp.ne.s32.totalorder %s131, %s134
    %p140 = scmp.eq.s32.totalorder %s11, 0
    %p141 = por %p139, %p140
    %p142 = scmp.ne.s32.totalorder %s131, %s134
    %p143 = scmp.eq.s32.totalorder %s16, 1
    %p144 = por %p142, %p143
    %p145 = scmp.ne.s32.totalorder %s134, %s135
    %p146 = scmp.eq.s32.totalorder %s16, 0
    %p147 = por %p145, %p146
    %p148 = scmp.ne.s32.totalorder %s134, %s135
    %p149 = scmp.eq.s32.totalorder %s17, 1
    %p150 = por %p148, %p149
    %p152 = scmp.ne.s32.totalorder %s135, %s151
    %p153 = scmp.eq.s32.totalorder %s17, 0
    %p154 = por %p152, %p153
    %p155 = scmp.le.s32.totalorder 1, %s11
    %p156 = scmp.lt.s32.totalorder %s11, 3
    %p157 = pnand %p155, %p156
    %p158 = pneg %p157
    // Predicated region
    $region9: #{autorec_forward.1} parent=5 // pred_check
      _
    $region10: #{autorec_forward.1} parent=5 // pred_check_branch
      %160 = sbr.rel (%p157) target = $region12
    $region11: #{autorec_forward.1} parent=5 // pred_region
      %s161 = ssub.s32 %s11, 1
      // Predicated region
      $region13: #{autorec_forward.1} parent=11 // pred_check
        %p162 = pneg %p58
      $region14: #{autorec_forward.1} parent=11 // pred_check_branch
        %164 = sbr.rel (%p162) target = $region16
      $region15: #{autorec_forward.1} parent=11 // pred_region
        _
      $region16: #{autorec_forward.1} parent=11 // pred_fallthru
        _
      // Predicated region
      $region17: #{autorec_forward.1} parent=11 // pred_check
        %p165 = pneg %p79
      $region18: #{autorec_forward.1} parent=11 // pred_check_branch
        %167 = sbr.rel (%p165) target = $region20
      $region19: #{autorec_forward.1} parent=11 // pred_region
        _
      $region20: #{autorec_forward.1} parent=11 // pred_fallthru
        _
      // Predicated region
      $region21: #{autorec_forward.1} parent=11 // pred_check
        %p168 = pneg %p100
      $region22: #{autorec_forward.1} parent=11 // pred_check_branch
        %170 = sbr.rel (%p168) target = $region24
      $region23: #{autorec_forward.1} parent=11 // pred_region
        _
      $region24: #{autorec_forward.1} parent=11 // pred_fallthru
        _
      // Predicated region
      $region25: #{autorec_forward.1} parent=11 // pred_check
        %p171 = pneg %p121
      $region26: #{autorec_forward.1} parent=11 // pred_check_branch
        %173 = sbr.rel (%p171) target = $region28
      $region27: #{autorec_forward.1} parent=11 // pred_region
        _
      $region28: #{autorec_forward.1} parent=11 // pred_fallthru
        _
    $region12: #{autorec_forward.1} parent=5 // pred_fallthru
      _
    %p174 = scmp.lt.s32.totalorder %s11, 2
    // Predicated region
    $region29: #{autorec_forward.1} parent=5 // pred_check
      %p175 = pneg %p174
    $region30: #{autorec_forward.1} parent=5 // pred_check_branch
      %177 = sbr.rel (%p175) target = $region32
    $region31: #{autorec_forward.1} parent=5 // pred_region
      // Predicated region
      $region33: #{autorec_forward.1} parent=31 // pred_check
        %p178 = pneg %p31
      $region34: #{autorec_forward.1} parent=31 // pred_check_branch
        %180 = sbr.rel (%p178) target = $region36
      $region35: #{autorec_forward.1} parent=31 // pred_region
        %s181 = smul.u32 13, %s11
        %p182 = scmp.lt.s32.totalorder %s181, 25
        %s183 = scalar_select %p182, %s181, 25
        %s184 = smul.addr %s183, 3
        %s185 = smul.addr %s184, 4
        %s186 = scalar_lea.vmem %s0, %s185
        %s187 = smul.u32 13, %s11
      $region36: #{autorec_forward.1} parent=31 // pred_fallthru
        _
    $region32: #{autorec_forward.1} parent=5 // pred_fallthru
      _
    %p188 = scmp.le.s32.totalorder 1, %s11
    %p189 = scmp.lt.s32.totalorder %s11, 3
    %p190 = pnand %p188, %p189
    %p191 = pneg %p190
    // Predicated region
    $region37: #{autorec_forward.1} parent=5 // pred_check
      _
    $region38: #{autorec_forward.1} parent=5 // pred_check_branch
      %193 = sbr.rel (%p190) target = $region40
    $region39: #{autorec_forward.1} parent=5 // pred_region
      %s194 = ssub.s32 %s11, 1
      %s195 = smul.u32 13, %s16
      %p196 = scmp.lt.s32.totalorder %s195, 25
      %s197 = scalar_select %p196, %s195, 25
      %s198 = smul.addr %s197, 3
      %s199 = smul.addr %s198, 4
      %s200 = scalar_lea.vmem %s0, %s199
      %p201 = pneg %p37
      %p202 = pneg %p34
      %p203 = pneg %p58
      %p204 = pneg %p55
      %p205 = pneg %p79
      %p206 = pneg %p76
      %p207 = pneg %p100
      %p208 = pneg %p97
      %p209 = pneg %p121
      %p210 = pneg %p118
      %p211 = pneg %p147
      %p212 = pneg %p144
      %s213 = smul.u32 13, %s16
      %p214 = scmp.lt.s32.totalorder %s213, 25
      %s215 = scalar_select %p214, %s213, 25
      %s216 = smul.addr %s215, 3
      %s217 = smul.addr %s216, 4
      %s218 = scalar_lea.vmem %s5, %s217
      %s219 = smul.u32 13, %s16
      %p220 = scmp.lt.s32.totalorder %s219, 25
      %s221 = scalar_select %p220, %s219, 25
      %s222 = smul.addr %s221, 3
      %s223 = smul.addr %s222, 4
      %s224 = scalar_lea.vmem %s0, %s223
      %s225 = smul.u32 13, %s16
      %s226 = smul.u32 13, %s16
      %p227 = scmp.lt.s32.totalorder %s226, 25
      %s228 = scalar_select %p227, %s226, 25
      %s229 = smul.addr %s228, 3
      %s230 = smul.addr %s229, 4
      %s231 = scalar_lea.vmem %s5, %s230
      %s232 = smul.u32 13, %s16
      %v233 = vld [vmem:[%s224] sm:$0xff]
      %v234 = vld [vmem:[%s224 + $0x8] sm:$0xf]
      %v235 = vld [vmem:[%s224 + $0xc] sm:$0xff]
      %v236 = vld [vmem:[%s224 + $0x14] sm:$0xf]
      %v237 = vld [vmem:[%s224 + $0x18] sm:$0xff]
      %v238 = vld [vmem:[%s224 + $0x20] sm:$0xf]
      %v239 = vld [vmem:[%s224 + $0x24] sm:$0xff]
      %v240 = vld [vmem:[%s224 + $0x2c] sm:$0xf]
      %v241 = vld [vmem:[%s224 + $0x30] sm:$0xff]
      %v242 = vld [vmem:[%s224 + $0x38] sm:$0xf]
      %v243 = vld [vmem:[%s224 + $0x3c] sm:$0xff]
      %v244 = vld [vmem:[%s224 + $0x44] sm:$0xf]
      %v245 = vld [vmem:[%s224 + $0x48] sm:$0xff]
      %v246 = vld [vmem:[%s224 + $0x50] sm:$0xf]
      %v247 = vld [vmem:[%s224 + $0x54] sm:$0xff]
      %v248 = vld [vmem:[%s224 + $0x5c] sm:$0xf]
      %v249 = vld [vmem:[%s224 + $0x60] sm:$0xff]
      %v250 = vld [vmem:[%s224 + $0x68] sm:$0xf]
      %v251 = vld [vmem:[%s224 + $0x6c] sm:$0xff]
      %v252 = vld [vmem:[%s224 + $0x74] sm:$0xf]
      %v253 = vld [vmem:[%s224 + $0x78] sm:$0xff]
      %v254 = vld [vmem:[%s224 + $0x80] sm:$0xf]
      %v255 = vld [vmem:[%s224 + $0x84] sm:$0xff]
      %v256 = vld [vmem:[%s224 + $0x8c] sm:$0xf]
      %v257 = vld [vmem:[%s224 + $0x90] sm:$0xff]
      %v258 = vld [vmem:[%s224 + $0x98] sm:$0xf]
      %v259 = vld [vmem:[%s1] sm:$0xf]
      %v260 = vld [vmem:[%s1 + $0x4] sm:$0xf]
      %v261 = vld [vmem:[%s1 + $0x8] sm:$0xf]
      %v262 = vld [vmem:[%s1 + $0xc] sm:$0xf]
      %v263 = vld [vmem:[%s1 + $0x10] sm:$0xf]
      %v264 = vld [vmem:[%s1 + $0x14] sm:$0xf]
      %v265 = vld [vmem:[%s1 + $0x18] sm:$0xf]
      %v266 = vld [vmem:[%s1 + $0x1c] sm:$0xf]
      %v267 = vld [vmem:[%s1 + $0x20] sm:$0xf]
      %v268 = vld [vmem:[%s1 + $0x24] sm:$0xf]
      %v269 = vld [vmem:[%s1 + $0x28] sm:$0xf]
      %v270 = vld [vmem:[%s1 + $0x2c] sm:$0xf]
      %v271 = vld [vmem:[%s1 + $0x30] sm:$0xf]
      %v272 = vld [vmem:[%s1 + $0x34] sm:$0xf]
      %v273 = vld [vmem:[%s1 + $0x38] sm:$0xf]
      %v274 = vld [vmem:[%s1 + $0x3c] sm:$0xf]
      %v275 = vld [vmem:[%s1 + $0x40] sm:$0xf]
      %v276 = vld [vmem:[%s1 + $0x44] sm:$0xf]
      %v277 = vld [vmem:[%s1 + $0x48] sm:$0xf]
      %v278 = vld [vmem:[%s1 + $0x4c] sm:$0xf]
      %v279 = vld [vmem:[%s1 + $0x50] sm:$0xf]
      %v280 = vld [vmem:[%s1 + $0x54] sm:$0xf]
      %v281 = vld [vmem:[%s1 + $0x58] sm:$0xf]
      %v282 = vld [vmem:[%s1 + $0x5c] sm:$0xf]
      %v283 = vld [vmem:[%s1 + $0x60] sm:$0xf]
      %v284 = vld [vmem:[%s1 + $0x64] sm:$0xf]
      %v285 = vld [vmem:[%s1 + $0x68] sm:$0xf]
      %v286 = vld [vmem:[%s1 + $0x6c] sm:$0xf]
      %v287 = vld [vmem:[%s1 + $0x70] sm:$0xf]
      %v288 = vld [vmem:[%s1 + $0x74] sm:$0xf]
      %v289 = vld [vmem:[%s1 + $0x78] sm:$0xf]
      %v290 = vld [vmem:[%s1 + $0x7c] sm:$0xf]
      %v291 = vld [vmem:[%s1 + $0x80] sm:$0xf]
      %v292 = vld [vmem:[%s1 + $0x84] sm:$0xf]
      %v293 = vld [vmem:[%s1 + $0x88] sm:$0xf]
      %v294 = vld [vmem:[%s1 + $0x8c] sm:$0xf]
      %v295 = vld [vmem:[%s1 + $0x90] sm:$0xf]
      %v296 = vld [vmem:[%s1 + $0x94] sm:$0xf]
      %v297 = vld [vmem:[%s1 + $0x98] sm:$0xf]
      %v298 = vld [vmem:[%s1 + $0x9c] sm:$0xf]
      %v299 = vld [vmem:[%s1 + $0xa0] sm:$0xf]
      %v300 = vld [vmem:[%s1 + $0xa4] sm:$0xf]
      %v301 = vld [vmem:[%s1 + $0xa8] sm:$0xf]
      %v302 = vld [vmem:[%s1 + $0xac] sm:$0xf]
      %v303 = vld [vmem:[%s1 + $0xb0] sm:$0xf]
      %v304 = vld [vmem:[%s1 + $0xb4] sm:$0xf]
      %v305 = vld [vmem:[%s1 + $0xb8] sm:$0xf]
      %v306 = vld [vmem:[%s1 + $0xbc] sm:$0xf]
      %v307 = vld [vmem:[%s2] sm:$0x1]
      %v309 = vperm.slane %v307, 0
      %v337 = vunpack.c.l.b16 %v233
      %v338 = vunpack.c.h.b16 %v233
      %v339 = vunpack.c.l.b16 %v234
      %v340 = vunpack.c.l.b16 %v235
      %v341 = vunpack.c.h.b16 %v235
      %v342 = vunpack.c.l.b16 %v236
      %v343 = vunpack.c.l.b16 %v237
      %v344 = vunpack.c.h.b16 %v237
      %v345 = vunpack.c.l.b16 %v238
      %v346 = vunpack.c.l.b16 %v239
      %v347 = vunpack.c.h.b16 %v239
      %v348 = vunpack.c.l.b16 %v240
      %v349 = vunpack.c.l.b16 %v241
      %v350 = vunpack.c.h.b16 %v241
      %v351 = vunpack.c.l.b16 %v242
      %v352 = vunpack.c.l.b16 %v243
      %v353 = vunpack.c.h.b16 %v243
      %v354 = vunpack.c.l.b16 %v244
      %v355 = vunpack.c.l.b16 %v245
      %v356 = vunpack.c.h.b16 %v245
      %v357 = vunpack.c.l.b16 %v246
      %v358 = vunpack.c.l.b16 %v247
      %v359 = vunpack.c.h.b16 %v247
      %v360 = vunpack.c.l.b16 %v248
      %v361 = vunpack.c.l.b16 %v249
      %v362 = vunpack.c.h.b16 %v249
      %v363 = vunpack.c.l.b16 %v250
      %v364 = vunpack.c.l.b16 %v251
      %v365 = vunpack.c.h.b16 %v251
      %v366 = vunpack.c.l.b16 %v252
      %v367 = vunpack.c.l.b16 %v253
      %v368 = vunpack.c.h.b16 %v253
      %v369 = vunpack.c.l.b16 %v254
      %v370 = vunpack.c.l.b16 %v255
      %v371 = vunpack.c.h.b16 %v255
      %v372 = vunpack.c.l.b16 %v256
      %v373 = vunpack.c.l.b16 %v257
      %v374 = vunpack.c.h.b16 %v257
      %v375 = vunpack.c.l.b16 %v258
      %v376 = vpack.c.b16 %v340, %v337
      %v377 = vpack.c.b16 %v341, %v338
      %v378 = vpack.c.b16 %v342, %v339
      %v379 = vpack.c.b16 %v346, %v343
      %v380 = vpack.c.b16 %v347, %v344
      %v381 = vpack.c.b16 %v348, %v345
      %v382 = vpack.c.b16 %v352, %v349
      %v383 = vpack.c.b16 %v353, %v350
      %v384 = vpack.c.b16 %v354, %v351
      %v385 = vpack.c.b16 %v358, %v355
      %v386 = vpack.c.b16 %v359, %v356
      %v387 = vpack.c.b16 %v360, %v357
      %v388 = vpack.c.b16 %v364, %v361
      %v389 = vpack.c.b16 %v365, %v362
      %v390 = vpack.c.b16 %v366, %v363
      %v391 = vpack.c.b16 %v370, %v367
      %v392 = vpack.c.b16 %v371, %v368
      %v393 = vpack.c.b16 %v372, %v369
      %v394 = vpack.c.b16 %v373, %v373
      %v395 = vpack.c.b16 %v374, %v374
      %v396 = vpack.c.b16 %v375, %v375
      %v466 = vunpack.c.l.b16 %v259
      %v467 = vunpack.c.l.b16 %v260
      %v468 = vunpack.c.l.b16 %v261
      %v469 = vunpack.c.l.b16 %v262
      %v470 = vunpack.c.l.b16 %v263
      %v471 = vunpack.c.l.b16 %v264
      %v472 = vunpack.c.l.b16 %v265
      %v473 = vunpack.c.l.b16 %v266
      %v474 = vunpack.c.l.b16 %v267
      %v475 = vunpack.c.l.b16 %v268
      %v476 = vunpack.c.l.b16 %v269
      %v477 = vunpack.c.l.b16 %v270
      %v478 = vunpack.c.l.b16 %v271
      %v479 = vunpack.c.l.b16 %v272
      %v480 = vunpack.c.l.b16 %v273
      %v481 = vunpack.c.l.b16 %v274
      %v482 = vunpack.c.l.b16 %v275
      %v483 = vunpack.c.l.b16 %v276
      %v484 = vunpack.c.l.b16 %v277
      %v485 = vunpack.c.l.b16 %v278
      %v486 = vunpack.c.l.b16 %v279
      %v487 = vunpack.c.l.b16 %v280
      %v488 = vunpack.c.l.b16 %v281
      %v489 = vunpack.c.l.b16 %v282
      %v490 = vunpack.c.l.b16 %v283
      %v491 = vunpack.c.l.b16 %v284
      %v492 = vunpack.c.l.b16 %v285
      %v493 = vunpack.c.l.b16 %v286
      %v494 = vunpack.c.l.b16 %v287
      %v495 = vunpack.c.l.b16 %v288
      %v496 = vunpack.c.l.b16 %v289
      %v497 = vunpack.c.l.b16 %v290
      %v498 = vunpack.c.l.b16 %v291
      %v499 = vunpack.c.l.b16 %v292
      %v500 = vunpack.c.l.b16 %v293
      %v501 = vunpack.c.l.b16 %v294
      %v502 = vunpack.c.l.b16 %v295
      %v503 = vunpack.c.l.b16 %v296
      %v504 = vunpack.c.l.b16 %v297
      %v505 = vunpack.c.l.b16 %v298
      %v506 = vunpack.c.l.b16 %v299
      %v507 = vunpack.c.l.b16 %v300
      %v508 = vunpack.c.l.b16 %v301
      %v509 = vunpack.c.l.b16 %v302
      %v510 = vunpack.c.l.b16 %v303
      %v511 = vunpack.c.l.b16 %v304
      %v512 = vunpack.c.l.b16 %v305
      %v513 = vunpack.c.l.b16 %v306
      %v514 = vpack.c.b16 %v467, %v466
      %v515 = vpack.c.b16 %v469, %v468
      %v516 = vpack.c.b16 %v471, %v470
      %v517 = vpack.c.b16 %v473, %v472
      %v518 = vpack.c.b16 %v475, %v474
      %v519 = vpack.c.b16 %v477, %v476
      %v520 = vpack.c.b16 %v479, %v478
      %v521 = vpack.c.b16 %v481, %v480
      %v522 = vpack.c.b16 %v483, %v482
      %v523 = vpack.c.b16 %v485, %v484
      %v524 = vpack.c.b16 %v487, %v486
      %v525 = vpack.c.b16 %v489, %v488
      %v526 = vpack.c.b16 %v491, %v490
      %v527 = vpack.c.b16 %v493, %v492
      %v528 = vpack.c.b16 %v495, %v494
      %v529 = vpack.c.b16 %v497, %v496
      %v530 = vpack.c.b16 %v499, %v498
      %v531 = vpack.c.b16 %v501, %v500
      %v532 = vpack.c.b16 %v503, %v502
      %v533 = vpack.c.b16 %v505, %v504
      %v534 = vpack.c.b16 %v507, %v506
      %v535 = vpack.c.b16 %v509, %v508
      %v536 = vpack.c.b16 %v511, %v510
      %v537 = vpack.c.b16 %v513, %v512
      %562 = vmatpush.bf16.msra.mxu0 %v521
      %563 = vmatpush.bf16.msra.mxu0 %v520
      %564 = vmatpush.bf16.msra.mxu0 %v519
      %565 = vmatpush.bf16.msra.mxu0 %v518
      %566 = vmatpush.bf16.msra.mxu0 %v517
      %567 = vmatpush.bf16.msra.mxu0 %v516
      %568 = vmatpush.bf16.msra.mxu0 %v515
      %569 = vmatpush.bf16.msra.mxu0 %v514
      %570 = vmatmul.bf16.gmra.mxu0 %v376
      %v571 = vpop.f32.mrf.mxu0
      %v572 = vadd.f32 %v309, %v571
      %v573 = vpop.f32.mrf.mxu0
      %v574 = vadd.f32 %v309, %v573
      %575 = vmatmul.bf16.gmra.mxu0 %v379
      %v576 = vpop.f32.mrf.mxu0
      %v577 = vadd.f32 %v309, %v576
      %v578 = vpop.f32.mrf.mxu0
      %v579 = vadd.f32 %v309, %v578
      %580 = vmatmul.bf16.gmra.mxu0 %v382
      %v581 = vpop.f32.mrf.mxu0
      %v582 = vadd.f32 %v309, %v581
      %v583 = vpop.f32.mrf.mxu0
      %v584 = vadd.f32 %v309, %v583
      %585 = vmatmul.bf16.gmra.mxu0 %v385
      %v586 = vpop.f32.mrf.mxu0
      %v587 = vadd.f32 %v309, %v586
      %v588 = vpop.f32.mrf.mxu0
      %v589 = vadd.f32 %v309, %v588
      %590 = vmatmul.bf16.gmra.mxu0 %v388
      %v591 = vpop.f32.mrf.mxu0
      %v592 = vadd.f32 %v309, %v591
      %v593 = vpop.f32.mrf.mxu0
      %v594 = vadd.f32 %v309, %v593
      %595 = vmatmul.bf16.gmra.mxu0 %v391
      %v596 = vpop.f32.mrf.mxu0
      %v597 = vadd.f32 %v309, %v596
      %v598 = vpop.f32.mrf.mxu0
      %v599 = vadd.f32 %v309, %v598
      %600 = vmatmul.bf16.gmra.mxu0 %v394
      %v601 = vpop.f32.mrf.mxu0
      %v602 = vadd.f32 %v309, %v601
      %v603 = vpop.f32.mrf.mxu0
      %604 = vdwg.mxu0
      %605 = vmatpush.bf16.msra.mxu0 %v529
      %606 = vmatpush.bf16.msra.mxu0 %v528
      %607 = vmatpush.bf16.msra.mxu0 %v527
      %608 = vmatpush.bf16.msra.mxu0 %v526
      %609 = vmatpush.bf16.msra.mxu0 %v525
      %610 = vmatpush.bf16.msra.mxu0 %v524
      %611 = vmatpush.bf16.msra.mxu0 %v523
      %612 = vmatpush.bf16.msra.mxu0 %v522
      %613 = vmatmul.bf16.gmra.mxu0 %v377
      %v614 = vpop.f32.mrf.mxu0
      %v615 = vadd.f32 %v572, %v614
      %v616 = vpop.f32.mrf.mxu0
      %v617 = vadd.f32 %v574, %v616
      %618 = vmatmul.bf16.gmra.mxu0 %v380
      %v619 = vpop.f32.mrf.mxu0
      %v620 = vadd.f32 %v577, %v619
      %v621 = vpop.f32.mrf.mxu0
      %v622 = vadd.f32 %v579, %v621
      %623 = vmatmul.bf16.gmra.mxu0 %v383
      %v624 = vpop.f32.mrf.mxu0
      %v625 = vadd.f32 %v582, %v624
      %v626 = vpop.f32.mrf.mxu0
      %v627 = vadd.f32 %v584, %v626
      %628 = vmatmul.bf16.gmra.mxu0 %v386
      %v629 = vpop.f32.mrf.mxu0
      %v630 = vadd.f32 %v587, %v629
      %v631 = vpop.f32.mrf.mxu0
      %v632 = vadd.f32 %v589, %v631
      %633 = vmatmul.bf16.gmra.mxu0 %v389
      %v634 = vpop.f32.mrf.mxu0
      %v635 = vadd.f32 %v592, %v634
      %v636 = vpop.f32.mrf.mxu0
      %v637 = vadd.f32 %v594, %v636
      %638 = vmatmul.bf16.gmra.mxu0 %v392
      %v639 = vpop.f32.mrf.mxu0
      %v640 = vadd.f32 %v597, %v639
      %v641 = vpop.f32.mrf.mxu0
      %v642 = vadd.f32 %v599, %v641
      %643 = vmatmul.bf16.gmra.mxu0 %v395
      %v644 = vpop.f32.mrf.mxu0
      %v645 = vadd.f32 %v602, %v644
      %v646 = vpop.f32.mrf.mxu0
      %647 = vdwg.mxu0
      %648 = vmatpush.bf16.msra.mxu0 %v537
      %649 = vmatpush.bf16.msra.mxu0 %v536
      %650 = vmatpush.bf16.msra.mxu0 %v535
      %651 = vmatpush.bf16.msra.mxu0 %v534
      %652 = vmatpush.bf16.msra.mxu0 %v533
      %653 = vmatpush.bf16.msra.mxu0 %v532
      %654 = vmatpush.bf16.msra.mxu0 %v531
      %655 = vmatpush.bf16.msra.mxu0 %v530
      %656 = vmatmul.bf16.gmra.mxu0 %v378
      %v657 = vpop.f32.mrf.mxu0
      %v658 = vadd.f32 %v615, %v657
      %v659 = vpop.f32.mrf.mxu0
      %v660 = vadd.f32 %v617, %v659
      %661 = vmatmul.bf16.gmra.mxu0 %v381
      %v662 = vpop.f32.mrf.mxu0
      %v663 = vadd.f32 %v620, %v662
      %v664 = vpop.f32.mrf.mxu0
      %v665 = vadd.f32 %v622, %v664
      %666 = vmatmul.bf16.gmra.mxu0 %v384
      %v667 = vpop.f32.mrf.mxu0
      %v668 = vadd.f32 %v625, %v667
      %v669 = vpop.f32.mrf.mxu0
      %v670 = vadd.f32 %v627, %v669
      %671 = vmatmul.bf16.gmra.mxu0 %v387
      %v672 = vpop.f32.mrf.mxu0
      %v673 = vadd.f32 %v630, %v672
      %v674 = vpop.f32.mrf.mxu0
      %v675 = vadd.f32 %v632, %v674
      %676 = vmatmul.bf16.gmra.mxu0 %v390
      %v677 = vpop.f32.mrf.mxu0
      %v678 = vadd.f32 %v635, %v677
      %v679 = vpop.f32.mrf.mxu0
      %v680 = vadd.f32 %v637, %v679
      %681 = vmatmul.bf16.gmra.mxu0 %v393
      %v682 = vpop.f32.mrf.mxu0
      %v683 = vadd.f32 %v640, %v682
      %v684 = vpop.f32.mrf.mxu0
      %v685 = vadd.f32 %v642, %v684
      %686 = vmatmul.bf16.gmra.mxu0 %v396
      %v687 = vpop.f32.mrf.mxu0
      %v688 = vadd.f32 %v645, %v687
      %v689 = vpop.f32.mrf.mxu0
      %690 = vdwg.mxu0
      %v691 = vxor.u32 %v658, 2147483648
      %v692 = vxor.u32 %v660, 2147483648
      %v693 = vxor.u32 %v663, 2147483648
      %v694 = vxor.u32 %v665, 2147483648
      %v695 = vxor.u32 %v668, 2147483648
      %v696 = vxor.u32 %v670, 2147483648
      %v697 = vxor.u32 %v673, 2147483648
      %v698 = vxor.u32 %v675, 2147483648
      %v699 = vxor.u32 %v678, 2147483648
      %v700 = vxor.u32 %v680, 2147483648
      %v701 = vxor.u32 %v683, 2147483648
      %v702 = vxor.u32 %v685, 2147483648
      %v703 = vxor.u32 %v688, 2147483648
      %v704 = vmul.f32 %v691, 1.442695
      %v705 = vpow.pop %v704
      %v706 = vmul.f32 %v692, 1.442695
      %v707 = vpow.pop %v706
      %v708 = vmul.f32 %v693, 1.442695
      %v709 = vpow.pop %v708
      %v710 = vmul.f32 %v694, 1.442695
      %v711 = vpow.pop %v710
      %v712 = vmul.f32 %v695, 1.442695
      %v713 = vpow.pop %v712
      %v714 = vmul.f32 %v696, 1.442695
      %v715 = vpow.pop %v714
      %v716 = vmul.f32 %v697, 1.442695
      %v717 = vpow.pop %v716
      %v718 = vmul.f32 %v698, 1.442695
      %v719 = vpow.pop %v718
      %v720 = vmul.f32 %v699, 1.442695
      %v721 = vpow.pop %v720
      %v722 = vmul.f32 %v700, 1.442695
      %v723 = vpow.pop %v722
      %v724 = vmul.f32 %v701, 1.442695
      %v725 = vpow.pop %v724
      %v726 = vmul.f32 %v702, 1.442695
      %v727 = vpow.pop %v726
      %v728 = vmul.f32 %v703, 1.442695
      %v729 = vpow.pop %v728
      %v730 = vadd.f32 %v705, 1.0
      %v731 = vadd.f32 %v707, 1.0
      %v732 = vadd.f32 %v709, 1.0
      %v733 = vadd.f32 %v711, 1.0
      %v734 = vadd.f32 %v713, 1.0
      %v735 = vadd.f32 %v715, 1.0
      %v736 = vadd.f32 %v717, 1.0
      %v737 = vadd.f32 %v719, 1.0
      %v738 = vadd.f32 %v721, 1.0
      %v739 = vadd.f32 %v723, 1.0
      %v740 = vadd.f32 %v725, 1.0
      %v741 = vadd.f32 %v727, 1.0
      %v742 = vadd.f32 %v729, 1.0
      %v743 = vrcp.pop %v730
      %v744 = vmul.f32 %v730, %v743
      %v745 = vsub.f32 1.0, %v744
      %v746 = vmul.f32 %v743, %v745
      %v747 = vadd.f32 %v743, %v746
      %vm748 = vweird.f32 %v730
      %vm749 = vweird.f32 %v743
      %vm750 = vmor %vm748, %vm749
      %v751 = vsel %vm750, %v743, %v747
      %v752 = vand.u32 2147483647, %v730
      %vm753 = vcmp.eq.f32.partialorder %v752, 8.507059e+37
      %v754 = vand.u32 %v730, 2147483648
      %v755 = vor.u32 1.1754944e-38, %v754
      %v756 = vsel %vm753, %v755, %v751
      %v757 = vmul.f32 1.0, %v756
      %v758 = vrcp.pop %v731
      %v759 = vmul.f32 %v731, %v758
      %v760 = vsub.f32 1.0, %v759
      %v761 = vmul.f32 %v758, %v760
      %v762 = vadd.f32 %v758, %v761
      %vm763 = vweird.f32 %v731
      %vm764 = vweird.f32 %v758
      %vm765 = vmor %vm763, %vm764
      %v766 = vsel %vm765, %v758, %v762
      %v767 = vand.u32 2147483647, %v731
      %vm768 = vcmp.eq.f32.partialorder %v767, 8.507059e+37
      %v769 = vand.u32 %v731, 2147483648
      %v770 = vor.u32 1.1754944e-38, %v769
      %v771 = vsel %vm768, %v770, %v766
      %v772 = vmul.f32 1.0, %v771
      %v773 = vrcp.pop %v732
      %v774 = vmul.f32 %v732, %v773
      %v775 = vsub.f32 1.0, %v774
      %v776 = vmul.f32 %v773, %v775
      %v777 = vadd.f32 %v773, %v776
      %vm778 = vweird.f32 %v732
      %vm779 = vweird.f32 %v773
      %vm780 = vmor %vm778, %vm779
      %v781 = vsel %vm780, %v773, %v777
      %v782 = vand.u32 2147483647, %v732
      %vm783 = vcmp.eq.f32.partialorder %v782, 8.507059e+37
      %v784 = vand.u32 %v732, 2147483648
      %v785 = vor.u32 1.1754944e-38, %v784
      %v786 = vsel %vm783, %v785, %v781
      %v787 = vmul.f32 1.0, %v786
      %v788 = vrcp.pop %v733
      %v789 = vmul.f32 %v733, %v788
      %v790 = vsub.f32 1.0, %v789
      %v791 = vmul.f32 %v788, %v790
      %v792 = vadd.f32 %v788, %v791
      %vm793 = vweird.f32 %v733
      %vm794 = vweird.f32 %v788
      %vm795 = vmor %vm793, %vm794
      %v796 = vsel %vm795, %v788, %v792
      %v797 = vand.u32 2147483647, %v733
      %vm798 = vcmp.eq.f32.partialorder %v797, 8.507059e+37
      %v799 = vand.u32 %v733, 2147483648
      %v800 = vor.u32 1.1754944e-38, %v799
      %v801 = vsel %vm798, %v800, %v796
      %v802 = vmul.f32 1.0, %v801
      %v803 = vrcp.pop %v734
      %v804 = vmul.f32 %v734, %v803
      %v805 = vsub.f32 1.0, %v804
      %v806 = vmul.f32 %v803, %v805
      %v807 = vadd.f32 %v803, %v806
      %vm808 = vweird.f32 %v734
      %vm809 = vweird.f32 %v803
      %vm810 = vmor %vm808, %vm809
      %v811 = vsel %vm810, %v803, %v807
      %v812 = vand.u32 2147483647, %v734
      %vm813 = vcmp.eq.f32.partialorder %v812, 8.507059e+37
      %v814 = vand.u32 %v734, 2147483648
      %v815 = vor.u32 1.1754944e-38, %v814
      %v816 = vsel %vm813, %v815, %v811
      %v817 = vmul.f32 1.0, %v816
      %v818 = vrcp.pop %v735
      %v819 = vmul.f32 %v735, %v818
      %v820 = vsub.f32 1.0, %v819
      %v821 = vmul.f32 %v818, %v820
      %v822 = vadd.f32 %v818, %v821
      %vm823 = vweird.f32 %v735
      %vm824 = vweird.f32 %v818
      %vm825 = vmor %vm823, %vm824
      %v826 = vsel %vm825, %v818, %v822
      %v827 = vand.u32 2147483647, %v735
      %vm828 = vcmp.eq.f32.partialorder %v827, 8.507059e+37
      %v829 = vand.u32 %v735, 2147483648
      %v830 = vor.u32 1.1754944e-38, %v829
      %v831 = vsel %vm828, %v830, %v826
      %v832 = vmul.f32 1.0, %v831
      %v833 = vrcp.pop %v736
      %v834 = vmul.f32 %v736, %v833
      %v835 = vsub.f32 1.0, %v834
      %v836 = vmul.f32 %v833, %v835
      %v837 = vadd.f32 %v833, %v836
      %vm838 = vweird.f32 %v736
      %vm839 = vweird.f32 %v833
      %vm840 = vmor %vm838, %vm839
      %v841 = vsel %vm840, %v833, %v837
      %v842 = vand.u32 2147483647, %v736
      %vm843 = vcmp.eq.f32.partialorder %v842, 8.507059e+37
      %v844 = vand.u32 %v736, 2147483648
      %v845 = vor.u32 1.1754944e-38, %v844
      %v846 = vsel %vm843, %v845, %v841
      %v847 = vmul.f32 1.0, %v846
      %v848 = vrcp.pop %v737
      %v849 = vmul.f32 %v737, %v848
      %v850 = vsub.f32 1.0, %v849
      %v851 = vmul.f32 %v848, %v850
      %v852 = vadd.f32 %v848, %v851
      %vm853 = vweird.f32 %v737
      %vm854 = vweird.f32 %v848
      %vm855 = vmor %vm853, %vm854
      %v856 = vsel %vm855, %v848, %v852
      %v857 = vand.u32 2147483647, %v737
      %vm858 = vcmp.eq.f32.partialorder %v857, 8.507059e+37
      %v859 = vand.u32 %v737, 2147483648
      %v860 = vor.u32 1.1754944e-38, %v859
      %v861 = vsel %vm858, %v860, %v856
      %v862 = vmul.f32 1.0, %v861
      %v863 = vrcp.pop %v738
      %v864 = vmul.f32 %v738, %v863
      %v865 = vsub.f32 1.0, %v864
      %v866 = vmul.f32 %v863, %v865
      %v867 = vadd.f32 %v863, %v866
      %vm868 = vweird.f32 %v738
      %vm869 = vweird.f32 %v863
      %vm870 = vmor %vm868, %vm869
      %v871 = vsel %vm870, %v863, %v867
      %v872 = vand.u32 2147483647, %v738
      %vm873 = vcmp.eq.f32.partialorder %v872, 8.507059e+37
      %v874 = vand.u32 %v738, 2147483648
      %v875 = vor.u32 1.1754944e-38, %v874
      %v876 = vsel %vm873, %v875, %v871
      %v877 = vmul.f32 1.0, %v876
      %v878 = vrcp.pop %v739
      %v879 = vmul.f32 %v739, %v878
      %v880 = vsub.f32 1.0, %v879
      %v881 = vmul.f32 %v878, %v880
      %v882 = vadd.f32 %v878, %v881
      %vm883 = vweird.f32 %v739
      %vm884 = vweird.f32 %v878
      %vm885 = vmor %vm883, %vm884
      %v886 = vsel %vm885, %v878, %v882
      %v887 = vand.u32 2147483647, %v739
      %vm888 = vcmp.eq.f32.partialorder %v887, 8.507059e+37
      %v889 = vand.u32 %v739, 2147483648
      %v890 = vor.u32 1.1754944e-38, %v889
      %v891 = vsel %vm888, %v890, %v886
      %v892 = vmul.f32 1.0, %v891
      %v893 = vrcp.pop %v740
      %v894 = vmul.f32 %v740, %v893
      %v895 = vsub.f32 1.0, %v894
      %v896 = vmul.f32 %v893, %v895
      %v897 = vadd.f32 %v893, %v896
      %vm898 = vweird.f32 %v740
      %vm899 = vweird.f32 %v893
      %vm900 = vmor %vm898, %vm899
      %v901 = vsel %vm900, %v893, %v897
      %v902 = vand.u32 2147483647, %v740
      %vm903 = vcmp.eq.f32.partialorder %v902, 8.507059e+37
      %v904 = vand.u32 %v740, 2147483648
      %v905 = vor.u32 1.1754944e-38, %v904
      %v906 = vsel %vm903, %v905, %v901
      %v907 = vmul.f32 1.0, %v906
      %v908 = vrcp.pop %v741
      %v909 = vmul.f32 %v741, %v908
      %v910 = vsub.f32 1.0, %v909
      %v911 = vmul.f32 %v908, %v910
      %v912 = vadd.f32 %v908, %v911
      %vm913 = vweird.f32 %v741
      %vm914 = vweird.f32 %v908
      %vm915 = vmor %vm913, %vm914
      %v916 = vsel %vm915, %v908, %v912
      %v917 = vand.u32 2147483647, %v741
      %vm918 = vcmp.eq.f32.partialorder %v917, 8.507059e+37
      %v919 = vand.u32 %v741, 2147483648
      %v920 = vor.u32 1.1754944e-38, %v919
      %v921 = vsel %vm918, %v920, %v916
      %v922 = vmul.f32 1.0, %v921
      %v923 = vrcp.pop %v742
      %v924 = vmul.f32 %v742, %v923
      %v925 = vsub.f32 1.0, %v924
      %v926 = vmul.f32 %v923, %v925
      %v927 = vadd.f32 %v923, %v926
      %vm928 = vweird.f32 %v742
      %vm929 = vweird.f32 %v923
      %vm930 = vmor %vm928, %vm929
      %v931 = vsel %vm930, %v923, %v927
      %v932 = vand.u32 2147483647, %v742
      %vm933 = vcmp.eq.f32.partialorder %v932, 8.507059e+37
      %v934 = vand.u32 %v742, 2147483648
      %v935 = vor.u32 1.1754944e-38, %v934
      %v936 = vsel %vm933, %v935, %v931
      %v937 = vmul.f32 1.0, %v936
      %v938 = vpack.c.bf16 %v772, %v757
      %v939 = vpack.c.bf16 %v802, %v787
      %v940 = vpack.c.bf16 %v832, %v817
      %v941 = vpack.c.bf16 %v862, %v847
      %v942 = vpack.c.bf16 %v892, %v877
      %v943 = vpack.c.bf16 %v922, %v907
      %v944 = vpack.c.bf16 %v937, %v937
      %v945 = vld [vmem:[%s3] sm:$0xff]
      %v946 = vld [vmem:[%s3 + $0x8] sm:$0xf]
      %v947 = vld [vmem:[%s3 + $0xc] sm:$0xff]
      %v948 = vld [vmem:[%s3 + $0x14] sm:$0xf]
      %v949 = vld [vmem:[%s3 + $0x18] sm:$0xff]
      %v950 = vld [vmem:[%s3 + $0x20] sm:$0xf]
      %v951 = vld [vmem:[%s3 + $0x24] sm:$0xff]
      %v952 = vld [vmem:[%s3 + $0x2c] sm:$0xf]
      %v953 = vld [vmem:[%s3 + $0x30] sm:$0xff]
      %v954 = vld [vmem:[%s3 + $0x38] sm:$0xf]
      %v955 = vld [vmem:[%s3 + $0x3c] sm:$0xff]
      %v956 = vld [vmem:[%s3 + $0x44] sm:$0xf]
      %v957 = vld [vmem:[%s3 + $0x48] sm:$0xff]
      %v958 = vld [vmem:[%s3 + $0x50] sm:$0xf]
      %v959 = vld [vmem:[%s3 + $0x54] sm:$0xff]
      %v960 = vld [vmem:[%s3 + $0x5c] sm:$0xf]
      %v961 = vld [vmem:[%s3 + $0x60] sm:$0xff]
      %v962 = vld [vmem:[%s3 + $0x68] sm:$0xf]
      %v963 = vld [vmem:[%s3 + $0x6c] sm:$0xff]
      %v964 = vld [vmem:[%s3 + $0x74] sm:$0xf]
      %v965 = vld [vmem:[%s3 + $0x78] sm:$0xff]
      %v966 = vld [vmem:[%s3 + $0x80] sm:$0xf]
      %v967 = vld [vmem:[%s3 + $0x84] sm:$0xff]
      %v968 = vld [vmem:[%s3 + $0x8c] sm:$0xf]
      %v969 = vld [vmem:[%s3 + $0x90] sm:$0xff]
      %v970 = vld [vmem:[%s3 + $0x98] sm:$0xf]
      %v971 = vld [vmem:[%s3 + $0x9c] sm:$0xff]
      %v972 = vld [vmem:[%s3 + $0xa4] sm:$0xf]
      %v973 = vld [vmem:[%s3 + $0xa8] sm:$0xff]
      %v974 = vld [vmem:[%s3 + $0xb0] sm:$0xf]
      %v975 = vld [vmem:[%s3 + $0xb4] sm:$0xff]
      %v976 = vld [vmem:[%s3 + $0xbc] sm:$0xf]
      %v977 = vld [vmem:[%s4] sm:$0x7]
      %v979 = vperm.slane %v977, 0
      %v980 = vperm.slane %v977, 1
      %v981 = vperm.slane %v977, 2
      %v1017 = vunpack.c.l.b16 %v945
      %v1018 = vunpack.c.h.b16 %v945
      %v1019 = vunpack.c.l.b16 %v946
      %v1020 = vunpack.c.l.b16 %v947
      %v1021 = vunpack.c.h.b16 %v947
      %v1022 = vunpack.c.l.b16 %v948
      %v1023 = vunpack.c.l.b16 %v949
      %v1024 = vunpack.c.h.b16 %v949
      %v1025 = vunpack.c.l.b16 %v950
      %v1026 = vunpack.c.l.b16 %v951
      %v1027 = vunpack.c.h.b16 %v951
      %v1028 = vunpack.c.l.b16 %v952
      %v1029 = vunpack.c.l.b16 %v953
      %v1030 = vunpack.c.h.b16 %v953
      %v1031 = vunpack.c.l.b16 %v954
      %v1032 = vunpack.c.l.b16 %v955
      %v1033 = vunpack.c.h.b16 %v955
      %v1034 = vunpack.c.l.b16 %v956
      %v1035 = vunpack.c.l.b16 %v957
      %v1036 = vunpack.c.h.b16 %v957
      %v1037 = vunpack.c.l.b16 %v958
      %v1038 = vunpack.c.l.b16 %v959
      %v1039 = vunpack.c.h.b16 %v959
      %v1040 = vunpack.c.l.b16 %v960
      %v1041 = vunpack.c.l.b16 %v961
      %v1042 = vunpack.c.h.b16 %v961
      %v1043 = vunpack.c.l.b16 %v962
      %v1044 = vunpack.c.l.b16 %v963
      %v1045 = vunpack.c.h.b16 %v963
      %v1046 = vunpack.c.l.b16 %v964
      %v1047 = vunpack.c.l.b16 %v965
      %v1048 = vunpack.c.h.b16 %v965
      %v1049 = vunpack.c.l.b16 %v966
      %v1050 = vunpack.c.l.b16 %v967
      %v1051 = vunpack.c.h.b16 %v967
      %v1052 = vunpack.c.l.b16 %v968
      %v1053 = vunpack.c.l.b16 %v969
      %v1054 = vunpack.c.h.b16 %v969
      %v1055 = vunpack.c.l.b16 %v970
      %v1056 = vunpack.c.l.b16 %v971
      %v1057 = vunpack.c.h.b16 %v971
      %v1058 = vunpack.c.l.b16 %v972
      %v1059 = vunpack.c.l.b16 %v973
      %v1060 = vunpack.c.h.b16 %v973
      %v1061 = vunpack.c.l.b16 %v974
      %v1062 = vunpack.c.l.b16 %v975
      %v1063 = vunpack.c.h.b16 %v975
      %v1064 = vunpack.c.l.b16 %v976
      %v1065 = vpack.c.b16 %v1020, %v1017
      %v1066 = vpack.c.b16 %v1021, %v1018
      %v1067 = vpack.c.b16 %v1022, %v1019
      %v1068 = vpack.c.b16 %v1026, %v1023
      %v1069 = vpack.c.b16 %v1027, %v1024
      %v1070 = vpack.c.b16 %v1028, %v1025
      %v1071 = vpack.c.b16 %v1032, %v1029
      %v1072 = vpack.c.b16 %v1033, %v1030
      %v1073 = vpack.c.b16 %v1034, %v1031
      %v1074 = vpack.c.b16 %v1038, %v1035
      %v1075 = vpack.c.b16 %v1039, %v1036
      %v1076 = vpack.c.b16 %v1040, %v1037
      %v1077 = vpack.c.b16 %v1044, %v1041
      %v1078 = vpack.c.b16 %v1045, %v1042
      %v1079 = vpack.c.b16 %v1046, %v1043
      %v1080 = vpack.c.b16 %v1050, %v1047
      %v1081 = vpack.c.b16 %v1051, %v1048
      %v1082 = vpack.c.b16 %v1052, %v1049
      %v1083 = vpack.c.b16 %v1056, %v1053
      %v1084 = vpack.c.b16 %v1057, %v1054
      %v1085 = vpack.c.b16 %v1058, %v1055
      %v1086 = vpack.c.b16 %v1062, %v1059
      %v1087 = vpack.c.b16 %v1063, %v1060
      %v1088 = vpack.c.b16 %v1064, %v1061
      %1113 = vmatpush.bf16.msra.mxu0 %v1086
      %1114 = vmatpush.bf16.msra.mxu0 %v1083
      %1115 = vmatpush.bf16.msra.mxu0 %v1080
      %1116 = vmatpush.bf16.msra.mxu0 %v1077
      %1117 = vmatpush.bf16.msra.mxu0 %v1074
      %1118 = vmatpush.bf16.msra.mxu0 %v1071
      %1119 = vmatpush.bf16.msra.mxu0 %v1068
      %1120 = vmatpush.bf16.msra.mxu0 %v1065
      %1121 = vmatmul.bf16.gmra.mxu0 %v938
      %v1122 = vpop.f32.mrf.mxu0
      %v1123 = vadd.f32 %v979, %v1122
      %v1124 = vpop.f32.mrf.mxu0
      %v1125 = vadd.f32 %v979, %v1124
      %1126 = vmatmul.bf16.gmra.mxu0 %v939
      %v1127 = vpop.f32.mrf.mxu0
      %v1128 = vadd.f32 %v979, %v1127
      %v1129 = vpop.f32.mrf.mxu0
      %v1130 = vadd.f32 %v979, %v1129
      %1131 = vmatmul.bf16.gmra.mxu0 %v940
      %v1132 = vpop.f32.mrf.mxu0
      %v1133 = vadd.f32 %v979, %v1132
      %v1134 = vpop.f32.mrf.mxu0
      %v1135 = vadd.f32 %v979, %v1134
      %1136 = vmatmul.bf16.gmra.mxu0 %v941
      %v1137 = vpop.f32.mrf.mxu0
      %v1138 = vadd.f32 %v979, %v1137
      %v1139 = vpop.f32.mrf.mxu0
      %v1140 = vadd.f32 %v979, %v1139
      %1141 = vmatmul.bf16.gmra.mxu0 %v942
      %v1142 = vpop.f32.mrf.mxu0
      %v1143 = vadd.f32 %v979, %v1142
      %v1144 = vpop.f32.mrf.mxu0
      %v1145 = vadd.f32 %v979, %v1144
      %1146 = vmatmul.bf16.gmra.mxu0 %v943
      %v1147 = vpop.f32.mrf.mxu0
      %v1148 = vadd.f32 %v979, %v1147
      %v1149 = vpop.f32.mrf.mxu0
      %v1150 = vadd.f32 %v979, %v1149
      %1151 = vmatmul.bf16.gmra.mxu0 %v944
      %v1152 = vpop.f32.mrf.mxu0
      %v1153 = vadd.f32 %v979, %v1152
      %v1154 = vpop.f32.mrf.mxu0
      %1155 = vdwg.mxu0
      %1156 = vmatpush.bf16.msra.mxu0 %v1087
      %1157 = vmatpush.bf16.msra.mxu0 %v1084
      %1158 = vmatpush.bf16.msra.mxu0 %v1081
      %1159 = vmatpush.bf16.msra.mxu0 %v1078
      %1160 = vmatpush.bf16.msra.mxu0 %v1075
      %1161 = vmatpush.bf16.msra.mxu0 %v1072
      %1162 = vmatpush.bf16.msra.mxu0 %v1069
      %1163 = vmatpush.bf16.msra.mxu0 %v1066
      %1164 = vmatmul.bf16.gmra.mxu0 %v938
      %v1165 = vpop.f32.mrf.mxu0
      %v1166 = vadd.f32 %v980, %v1165
      %v1167 = vpop.f32.mrf.mxu0
      %v1168 = vadd.f32 %v980, %v1167
      %1169 = vmatmul.bf16.gmra.mxu0 %v939
      %v1170 = vpop.f32.mrf.mxu0
      %v1171 = vadd.f32 %v980, %v1170
      %v1172 = vpop.f32.mrf.mxu0
      %v1173 = vadd.f32 %v980, %v1172
      %1174 = vmatmul.bf16.gmra.mxu0 %v940
      %v1175 = vpop.f32.mrf.mxu0
      %v1176 = vadd.f32 %v980, %v1175
      %v1177 = vpop.f32.mrf.mxu0
      %v1178 = vadd.f32 %v980, %v1177
      %1179 = vmatmul.bf16.gmra.mxu0 %v941
      %v1180 = vpop.f32.mrf.mxu0
      %v1181 = vadd.f32 %v980, %v1180
      %v1182 = vpop.f32.mrf.mxu0
      %v1183 = vadd.f32 %v980, %v1182
      %1184 = vmatmul.bf16.gmra.mxu0 %v942
      %v1185 = vpop.f32.mrf.mxu0
      %v1186 = vadd.f32 %v980, %v1185
      %v1187 = vpop.f32.mrf.mxu0
      %v1188 = vadd.f32 %v980, %v1187
      %1189 = vmatmul.bf16.gmra.mxu0 %v943
      %v1190 = vpop.f32.mrf.mxu0
      %v1191 = vadd.f32 %v980, %v1190
      %v1192 = vpop.f32.mrf.mxu0
      %v1193 = vadd.f32 %v980, %v1192
      %1194 = vmatmul.bf16.gmra.mxu0 %v944
      %v1195 = vpop.f32.mrf.mxu0
      %v1196 = vadd.f32 %v980, %v1195
      %v1197 = vpop.f32.mrf.mxu0
      %1198 = vdwg.mxu0
      %1199 = vmatpush.bf16.msra.mxu0 %v1088
      %1200 = vmatpush.bf16.msra.mxu0 %v1085
      %1201 = vmatpush.bf16.msra.mxu0 %v1082
      %1202 = vmatpush.bf16.msra.mxu0 %v1079
      %1203 = vmatpush.bf16.msra.mxu0 %v1076
      %1204 = vmatpush.bf16.msra.mxu0 %v1073
      %1205 = vmatpush.bf16.msra.mxu0 %v1070
      %1206 = vmatpush.bf16.msra.mxu0 %v1067
      %1207 = vmatmul.bf16.gmra.mxu0 %v938
      %v1208 = vpop.f32.mrf.mxu0
      %v1209 = vadd.f32 %v981, %v1208
      %v1210 = vpop.f32.mrf.mxu0
      %v1211 = vadd.f32 %v981, %v1210
      %1212 = vmatmul.bf16.gmra.mxu0 %v939
      %v1213 = vpop.f32.mrf.mxu0
      %v1214 = vadd.f32 %v981, %v1213
      %v1215 = vpop.f32.mrf.mxu0
      %v1216 = vadd.f32 %v981, %v1215
      %1217 = vmatmul.bf16.gmra.mxu0 %v940
      %v1218 = vpop.f32.mrf.mxu0
      %v1219 = vadd.f32 %v981, %v1218
      %v1220 = vpop.f32.mrf.mxu0
      %v1221 = vadd.f32 %v981, %v1220
      %1222 = vmatmul.bf16.gmra.mxu0 %v941
      %v1223 = vpop.f32.mrf.mxu0
      %v1224 = vadd.f32 %v981, %v1223
      %v1225 = vpop.f32.mrf.mxu0
      %v1226 = vadd.f32 %v981, %v1225
      %1227 = vmatmul.bf16.gmra.mxu0 %v942
      %v1228 = vpop.f32.mrf.mxu0
      %v1229 = vadd.f32 %v981, %v1228
      %v1230 = vpop.f32.mrf.mxu0
      %v1231 = vadd.f32 %v981, %v1230
      %1232 = vmatmul.bf16.gmra.mxu0 %v943
      %v1233 = vpop.f32.mrf.mxu0
      %v1234 = vadd.f32 %v981, %v1233
      %v1235 = vpop.f32.mrf.mxu0
      %v1236 = vadd.f32 %v981, %v1235
      %1237 = vmatmul.bf16.gmra.mxu0 %v944
      %v1238 = vpop.f32.mrf.mxu0
      %v1239 = vadd.f32 %v981, %v1238
      %v1240 = vpop.f32.mrf.mxu0
      %1241 = vdwg.mxu0
      %v1242 = vpack.c.bf16 %v1166, %v1123
      %v1243 = vpack.c.bf16 %v1209, %v1209
      %v1244 = vpack.c.bf16 %v1168, %v1125
      %v1245 = vpack.c.bf16 %v1211, %v1211
      %v1246 = vpack.c.bf16 %v1171, %v1128
      %v1247 = vpack.c.bf16 %v1214, %v1214
      %v1248 = vpack.c.bf16 %v1173, %v1130
      %v1249 = vpack.c.bf16 %v1216, %v1216
      %v1250 = vpack.c.bf16 %v1176, %v1133
      %v1251 = vpack.c.bf16 %v1219, %v1219
      %v1252 = vpack.c.bf16 %v1178, %v1135
      %v1253 = vpack.c.bf16 %v1221, %v1221
      %v1254 = vpack.c.bf16 %v1181, %v1138
      %v1255 = vpack.c.bf16 %v1224, %v1224
      %v1256 = vpack.c.bf16 %v1183, %v1140
      %v1257 = vpack.c.bf16 %v1226, %v1226
      %v1258 = vpack.c.bf16 %v1186, %v1143
      %v1259 = vpack.c.bf16 %v1229, %v1229
      %v1260 = vpack.c.bf16 %v1188, %v1145
      %v1261 = vpack.c.bf16 %v1231, %v1231
      %v1262 = vpack.c.bf16 %v1191, %v1148
      %v1263 = vpack.c.bf16 %v1234, %v1234
      %v1264 = vpack.c.bf16 %v1193, %v1150
      %v1265 = vpack.c.bf16 %v1236, %v1236
      %v1266 = vpack.c.bf16 %v1196, %v1153
      %v1267 = vpack.c.bf16 %v1239, %v1239
      %1268 = vst [vmem:[%s231] sm:$0xff] %v1242
      %1269 = vst [vmem:[%s231 + $0x8] sm:$0xf] %v1243
      %1270 = vst [vmem:[%s231 + $0xc] sm:$0xff] %v1244
      %1271 = vst [vmem:[%s231 + $0x14] sm:$0xf] %v1245
      %1272 = vst [vmem:[%s231 + $0x18] sm:$0xff] %v1246
      %1273 = vst [vmem:[%s231 + $0x20] sm:$0xf] %v1247
      %1274 = vst [vmem:[%s231 + $0x24] sm:$0xff] %v1248
      %1275 = vst [vmem:[%s231 + $0x2c] sm:$0xf] %v1249
      %1276 = vst [vmem:[%s231 + $0x30] sm:$0xff] %v1250
      %1277 = vst [vmem:[%s231 + $0x38] sm:$0xf] %v1251
      %1278 = vst [vmem:[%s231 + $0x3c] sm:$0xff] %v1252
      %1279 = vst [vmem:[%s231 + $0x44] sm:$0xf] %v1253
      %1280 = vst [vmem:[%s231 + $0x48] sm:$0xff] %v1254
      %1281 = vst [vmem:[%s231 + $0x50] sm:$0xf] %v1255
      %1282 = vst [vmem:[%s231 + $0x54] sm:$0xff] %v1256
      %1283 = vst [vmem:[%s231 + $0x5c] sm:$0xf] %v1257
      %1284 = vst [vmem:[%s231 + $0x60] sm:$0xff] %v1258
      %1285 = vst [vmem:[%s231 + $0x68] sm:$0xf] %v1259
      %1286 = vst [vmem:[%s231 + $0x6c] sm:$0xff] %v1260
      %1287 = vst [vmem:[%s231 + $0x74] sm:$0xf] %v1261
      %1288 = vst [vmem:[%s231 + $0x78] sm:$0xff] %v1262
      %1289 = vst [vmem:[%s231 + $0x80] sm:$0xf] %v1263
      %1290 = vst [vmem:[%s231 + $0x84] sm:$0xff] %v1264
      %1291 = vst [vmem:[%s231 + $0x8c] sm:$0xf] %v1265
      %1292 = vst [vmem:[%s231 + $0x90] sm:$0xff] %v1266
      %1293 = vst [vmem:[%s231 + $0x98] sm:$0xf] %v1267
      %s1294 = smul.u32 13, %s16
      %p1295 = scmp.lt.s32.totalorder %s1294, 25
      %s1296 = scalar_select %p1295, %s1294, 25
      %s1297 = smul.addr %s1296, 3
      %s1298 = smul.addr %s1297, 4
      %s1299 = scalar_lea.vmem %s5, %s1298
      // Predicated region
      $region41: #{autorec_forward.1} parent=39 // pred_check
        %p1300 = pneg %p144
      $region42: #{autorec_forward.1} parent=39 // pred_check_branch
        %1302 = sbr.rel (%p1300) target = $region44
      $region43: #{autorec_forward.1} parent=39 // pred_region
        %s1303 = smul.u32 13, %s16
      $region44: #{autorec_forward.1} parent=39 // pred_fallthru
        _
    $region40: #{autorec_forward.1} parent=5 // pred_fallthru
      _
    %p1304 = scmp.le.s32.totalorder 2, %s11
    // Predicated region
    $region45: #{autorec_forward.1} parent=5 // pred_check
      %p1305 = pneg %p1304
    $region46: #{autorec_forward.1} parent=5 // pred_check_branch
      %1307 = sbr.rel (%p1305) target = $region48
    $region47: #{autorec_forward.1} parent=5 // pred_region
      %s1308 = ssub.s32 %s11, 2
      // Predicated region
      $region49: #{autorec_forward.1} parent=47 // pred_check
        %p1309 = pneg %p150
      $region50: #{autorec_forward.1} parent=47 // pred_check_branch
        %1311 = sbr.rel (%p1309) target = $region52
      $region51: #{autorec_forward.1} parent=47 // pred_region
        %s1312 = smul.u32 13, %s17
        %p1313 = scmp.lt.s32.totalorder %s1312, 25
        %s1314 = scalar_select %p1313, %s1312, 25
        %s1315 = smul.addr %s1314, 3
        %s1316 = smul.addr %s1315, 4
        %s1317 = scalar_lea.vmem %s5, %s1316
      $region52: #{autorec_forward.1} parent=47 // pred_fallthru
        _
    $region48: #{autorec_forward.1} parent=5 // pred_fallthru
      _
  $region6: #{autorec_forward.1} parent=0 // loop_footer
    %s15 = sadd.s32 1, %s11
  $region7: #{autorec_forward.1} parent=0 // loop_footer_branch
    %10 = sbr.rel target = $region3
  $region8: #{autorec_forward.1} parent=0 // loop_exit
    _

</llo_original>
